<compile_context>
chip_gen: v6e
topology: v6e:2x2x1
jax: 0.10.0
libtpu: 0.0.40
codegen_flags: <defaults>
</compile_context>

<pallas_src>
import jax
import jax.numpy as jnp
from jax.experimental import pallas as pl
from jax.experimental.pallas import tpu as pltpu


# ----------------------------------------------------------------------------
# Kernel: one (TILE_ROWS, C) tile of pixels through the whole bottleneck chain.
# ----------------------------------------------------------------------------
def _bottleneck_kernel(x_ref, noise_ref,
                       w1_ref, b1_ref,
                       w2_ref, c2_ref,
                       w3_ref, b4_ref,
                       o_ref):
    x = x_ref[...]                                              # (T, Cin) bf16

    # conv1 (1x1, no bias) with bn1 folded -> relu
    h = jnp.dot(x, w1_ref[...], preferred_element_type=jnp.float32)
    h = jnp.maximum(h + b1_ref[...], 0.0)

    # NoiseLayer: + fixed noise (broadcast over batch) -> relu
    h = jnp.maximum(h + noise_ref[...], 0.0)

    # bn2 -> conv2(1x1, bias) -> MaxPool2d(1,1)==identity -> bn3, all folded
    # into (w2, c2) on the host -> relu
    h = jnp.dot(h.astype(jnp.bfloat16), w2_ref[...],
                preferred_element_type=jnp.float32)
    h = jnp.maximum(h + c2_ref[...], 0.0)

    # conv3 (1x1, no bias) with bn4 folded
    y = jnp.dot(h.astype(jnp.bfloat16), w3_ref[...],
                preferred_element_type=jnp.float32)
    y = y + b4_ref[...]

    # identity shortcut + final relu (residual add kept in f32)
    y = y + x.astype(jnp.float32)
    o_ref[...] = jnp.maximum(y, 0.0).astype(o_ref.dtype)


# ----------------------------------------------------------------------------
# Wrapper
# ----------------------------------------------------------------------------
def _pick_tile_rows(hw, target):
    """Largest multiple of 8 that divides hw and is <= target."""
    t = min(target, hw)
    t -= t % 8
    while t >= 8 and hw % t != 0:
        t -= 8
    if t < 8:
        raise ValueError(f"H*W={hw} needs a multiple-of-8 divisor")
    return t


def noise_bottleneck(x_nchw, fp, *, tile_rows=512):
    """NoiseBottleneck forward. x_nchw: (N, Cin, H, W) f32, Cin == 4*planes.
    fp: folded params from fold_params()."""
    N, Cin, H, W = x_nchw.shape
    planes = fp["w1"].shape[1]
    Cout = 4 * planes
    assert Cin == Cout, "identity shortcut requires in_planes == 4*planes"
    HW = H * W
    tile = _pick_tile_rows(HW, tile_rows)
    n_hw_tiles = HW // tile

    # NCHW -> pixels-as-rows / channels-as-lanes, flattened over (N, HW).
    # TODO(synk): if the surrounding model kept NHWC activations these boundary
    # transposes (an extra HBM round trip each) could be removed entirely.
    x_rows = (jnp.transpose(x_nchw, (0, 2, 3, 1))
              .reshape(N * HW, Cin)
              .astype(jnp.bfloat16))

    row_block = lambda b, t: (b * n_hw_tiles + t, 0)
    full = lambda a: pl.BlockSpec(a.shape, lambda b, t: (0,) * a.ndim)

    out = pl.pallas_call(
        _bottleneck_kernel,
        out_shape=jax.ShapeDtypeStruct((N * HW, Cout), jnp.bfloat16),
        grid_spec=pltpu.PrefetchScalarGridSpec(
            num_scalar_prefetch=0,
            grid=(N, n_hw_tiles),
            in_specs=[
                pl.BlockSpec((tile, Cin), row_block),              # x tile
                pl.BlockSpec((tile, planes), lambda b, t: (t, 0)),  # noise tile
                full(fp["w1"]), full(fp["b1"]),
                full(fp["w2"]), full(fp["c2"]),
                full(fp["w3"]), full(fp["b4"]),
            ],
            out_specs=pl.BlockSpec((tile, Cout), row_block),
        ),
        compiler_params=pltpu.CompilerParams(
            dimension_semantics=("parallel", "parallel")),
    )(x_rows, fp["noise"], fp["w1"], fp["b1"], fp["w2"], fp["c2"],
      fp["w3"], fp["b4"])

    return jnp.transpose(out.reshape(N, H, W, Cout),
                         (0, 3, 1, 2)).astype(jnp.float32)


# ----------------------------------------------------------------------------
# Parameters: raw (torch-like) + host-side BN folding
# ----------------------------------------------------------------------------
def _bn_scale_bias(c, eps=1e-5):
    f32 = jnp.float32
    r = jnp.arange(c, dtype=f32) / c
    gamma = 1.0 + 0.1 * r
    beta = 0.05 * r
    mean = 0.01 * r
    var = 1.0 + 0.02 * r
    scale = gamma / jnp.sqrt(var + eps)
    bias = beta - mean * scale
    return scale, bias


def make_params(key, in_planes, planes, H, W, level=0.2):
    """Raw parameters: 1x1 conv weights as (Cin, Cout), BN in inference
    scale/bias form, NoiseLayer noise broadcast over the batch."""
    k_w1, k_w2, k_cb2, k_w3, k_noise = jax.random.split(key, 5)
    f32 = jnp.float32

    w1 = 0.1 * jax.random.normal(k_w1, (in_planes, planes), f32)
    w2 = 0.1 * jax.random.normal(k_w2, (planes, planes), f32)
    cb2 = 0.01 * jax.random.normal(k_cb2, (planes,), f32)
    w3 = 0.1 * jax.random.normal(k_w3, (planes, 4 * planes), f32)

    bn1_s, bn1_b = _bn_scale_bias(planes)
    bn2_s, bn2_b = _bn_scale_bias(planes)
    bn3_s, bn3_b = _bn_scale_bias(planes)
    bn4_s, bn4_b = _bn_scale_bias(4 * planes)

    # NoiseLayer noise: torch shape (planes, H, W), uniform -> (2u-1)*level
    u = jax.random.uniform(k_noise, (planes, H, W), f32)
    noise = jnp.transpose((2.0 * u - 1.0) * level, (1, 2, 0)).reshape(H * W, planes)

    return dict(w1=w1, w2=w2, cb2=cb2, w3=w3, noise=noise,
                bn1_s=bn1_s, bn1_b=bn1_b, bn2_s=bn2_s, bn2_b=bn2_b,
                bn3_s=bn3_s, bn3_b=bn3_b, bn4_s=bn4_s, bn4_b=bn4_b)


def fold_params(p):
    """Host-side BN folding + bf16 cast of the matmul operands.

    conv1->bn1        : w1' = w1 * diag(s1),        b1' = b1
    bn2->conv2->bn3   : w2' = diag(s2) w2 diag(s3), c2' = (b2@w2 + cb2)*s3 + b3
    conv3->bn4        : w3' = w3 * diag(s4),        b4' = b4
    """
    bf16 = jnp.bfloat16
    w1f = p["w1"] * p["bn1_s"][None, :]
    b1f = p["bn1_b"][None, :]
    w2f = (p["bn2_s"][:, None] * p["w2"]) * p["bn3_s"][None, :]
    c2f = ((p["bn2_b"] @ p["w2"] + p["cb2"]) * p["bn3_s"] + p["bn3_b"])[None, :]
    w3f = p["w3"] * p["bn4_s"][None, :]
    b4f = p["bn4_b"][None, :]
    return dict(w1=w1f.astype(bf16), b1=b1f,
                w2=w2f.astype(bf16), c2=c2f,
                w3=w3f.astype(bf16), b4=b4f,
                noise=p["noise"])


# ----------------------------------------------------------------------------
# References
# ----------------------------------------------------------------------------
def noise_bottleneck_ref_f32(x_nchw, p):
    """Pure-f32 reference mirroring the torch forward (inference BN)."""
    N, Cin, H, W = x_nchw.shape
    x = jnp.transpose(x_nchw, (0, 2, 3, 1)).reshape(N, H * W, Cin)
    h = x @ p["w1"]
    h = h * p["bn1_s"] + p["bn1_b"]
    h = jnp.maximum(h, 0.0)
    h = h + p["noise"][None]
    h = jnp.maximum(h, 0.0)
    h = h * p["bn2_s"] + p["bn2_b"]
    h = h @ p["w2"] + p["cb2"]
    # MaxPool2d(1, 1) == identity
    h = h * p["bn3_s"] + p["bn3_b"]
    h = jnp.maximum(h, 0.0)
    y = h @ p["w3"]
    y = y * p["bn4_s"] + p["bn4_b"]
    y = jnp.maximum(y + x, 0.0)
    Cout = y.shape[-1]
    return jnp.transpose(y.reshape(N, H, W, Cout), (0, 3, 1, 2))


def noise_bottleneck_ref_folded(x_nchw, fp):
    """Reference mirroring the kernel's folded-weight, mixed-precision math."""
    N, Cin, H, W = x_nchw.shape
    x = (jnp.transpose(x_nchw, (0, 2, 3, 1))
         .reshape(N, H * W, Cin).astype(jnp.bfloat16))
    h = jnp.dot(x, fp["w1"], preferred_element_type=jnp.float32)
    h = jnp.maximum(h + fp["b1"], 0.0)
    h = jnp.maximum(h + fp["noise"][None], 0.0)
    h = jnp.dot(h.astype(jnp.bfloat16), fp["w2"],
                preferred_element_type=jnp.float32)
    h = jnp.maximum(h + fp["c2"], 0.0)
    y = jnp.dot(h.astype(jnp.bfloat16), fp["w3"],
                preferred_element_type=jnp.float32)
    y = y + fp["b4"]
    y = jnp.maximum(y + x.astype(jnp.float32), 0.0).astype(jnp.bfloat16)
    Cout = y.shape[-1]
    return jnp.transpose(y.reshape(N, H, W, Cout),
                         (0, 3, 1, 2)).astype(jnp.float32)


if __name__ == "__main__":
    # Small shapes consistent with one NoiseBottleneck residual block:
    # planes=32 -> Cout = 4*planes = 128 (lane-dense output stores),
    # identity shortcut requires in_planes == 128.
    N, in_planes, planes, H, W = 2, 128, 32, 16, 16

    key = jax.random.PRNGKey(0)
    kx, kp = jax.random.split(key)
    x = jax.random.normal(kx, (N, in_planes, H, W), jnp.float32)

    params = make_params(kp, in_planes, planes, H, W, level=0.2)
    folded = fold_params(params)

    # tile_rows=128 splits the H*W=256 image into 2 HW tiles, exercising the
    # tiled (batch, HW-tile) grid and the per-tile noise indexing.
    y = noise_bottleneck(x, folded, tile_rows=128)
    y = jax.block_until_ready(y)

    assert y.shape == (N, 4 * planes, H, W)

    y_mirror = noise_bottleneck_ref_folded(x, folded)   # same mixed precision
    y_f32 = noise_bottleneck_ref_f32(x, params)         # pure-f32 torch math

    assert jnp.allclose(y, y_mirror, atol=1e-2, rtol=1e-2), \
        "mismatch vs bf16-mirrored reference"
    assert jnp.allclose(y, y_f32, atol=5e-2, rtol=5e-2), \
        "mismatch vs f32 reference"

    print("KERNEL_OK")
</pallas_src>

<mosaic_0001>
module attributes {stable_mosaic.version = 11 : i64} {
  func.func @_bottleneck_kernel(%arg0: i32, %arg1: i32, %arg2: memref<128x128xbf16, #tpu.memory_space<vmem>>, %arg3: memref<128x32xf32, #tpu.memory_space<vmem>>, %arg4: memref<128x32xbf16, #tpu.memory_space<vmem>>, %arg5: memref<1x32xf32, #tpu.memory_space<vmem>>, %arg6: memref<32x32xbf16, #tpu.memory_space<vmem>>, %arg7: memref<1x32xf32, #tpu.memory_space<vmem>>, %arg8: memref<32x128xbf16, #tpu.memory_space<vmem>>, %arg9: memref<1x128xf32, #tpu.memory_space<vmem>>, %arg10: memref<128x128xbf16, #tpu.memory_space<vmem>>) attributes {dimension_semantics = [#tpu.dimension_semantics<parallel>, #tpu.dimension_semantics<parallel>], iteration_bounds = array<i64: 2, 2>, scalar_prefetch = 0 : i64, scratch_operands = 0 : i64, tpu.core_type = #tpu.core_type<tc>, window_params = [{transform_indices = @transform_0, window_bounds = array<i64: 128, 128>}, {transform_indices = @transform_1, window_bounds = array<i64: 128, 32>}, {pipeline_mode = #tpu.pipeline_mode<synchronous>, transform_indices = @transform_2, window_bounds = array<i64: 128, 32>}, {pipeline_mode = #tpu.pipeline_mode<synchronous>, transform_indices = @transform_3, window_bounds = array<i64: 1, 32>}, {pipeline_mode = #tpu.pipeline_mode<synchronous>, transform_indices = @transform_4, window_bounds = array<i64: 32, 32>}, {pipeline_mode = #tpu.pipeline_mode<synchronous>, transform_indices = @transform_5, window_bounds = array<i64: 1, 32>}, {pipeline_mode = #tpu.pipeline_mode<synchronous>, transform_indices = @transform_6, window_bounds = array<i64: 32, 128>}, {pipeline_mode = #tpu.pipeline_mode<synchronous>, transform_indices = @transform_7, window_bounds = array<i64: 1, 128>}, {transform_indices = @transform_8, window_bounds = array<i64: 128, 128>}]} {
    %c0 = arith.constant 0 : index
    %c0_0 = arith.constant 0 : index
    %0 = vector.load %arg2[%c0, %c0_0] : memref<128x128xbf16, #tpu.memory_space<vmem>>, vector<128x128xbf16>
    %c0_1 = arith.constant 0 : index
    %c0_2 = arith.constant 0 : index
    %1 = vector.load %arg4[%c0_1, %c0_2] : memref<128x32xbf16, #tpu.memory_space<vmem>>, vector<128x32xbf16>
    %cst = arith.constant dense<0.000000e+00> : vector<128x32xf32>
    %2 = tpu.matmul %0, %1, %cst {dimension_numbers = #tpu.dot_dimension_numbers<[1], [0], [0], [1], [0, 0, 1, 1], [], []>} : vector<128x128xbf16>, vector<128x32xbf16>, vector<128x32xf32> -> vector<128x32xf32>
    %c0_3 = arith.constant 0 : index
    %c0_4 = arith.constant 0 : index
    %3 = vector.load %arg5[%c0_3, %c0_4] : memref<1x32xf32, #tpu.memory_space<vmem>>, vector<1x32xf32>
    %4 = vector.broadcast %3 : vector<1x32xf32> to vector<128x32xf32>
    %5 = arith.addf %2, %4 : vector<128x32xf32>
    %cst_5 = arith.constant 0.000000e+00 : f32
    %6 = vector.broadcast %cst_5 : f32 to vector<128x32xf32>
    %7 = arith.maximumf %5, %6 : vector<128x32xf32>
    %c0_6 = arith.constant 0 : index
    %c0_7 = arith.constant 0 : index
    %8 = vector.load %arg3[%c0_6, %c0_7] : memref<128x32xf32, #tpu.memory_space<vmem>>, vector<128x32xf32>
    %9 = arith.addf %7, %8 : vector<128x32xf32>
    %cst_8 = arith.constant 0.000000e+00 : f32
    %10 = vector.broadcast %cst_8 : f32 to vector<128x32xf32>
    %11 = arith.maximumf %9, %10 : vector<128x32xf32>
    %12 = arith.truncf %11 : vector<128x32xf32> to vector<128x32xbf16>
    %c0_9 = arith.constant 0 : index
    %c0_10 = arith.constant 0 : index
    %13 = vector.load %arg6[%c0_9, %c0_10] : memref<32x32xbf16, #tpu.memory_space<vmem>>, vector<32x32xbf16>
    %cst_11 = arith.constant dense<0.000000e+00> : vector<128x32xf32>
    %14 = tpu.matmul %12, %13, %cst_11 {dimension_numbers = #tpu.dot_dimension_numbers<[1], [0], [0], [1], [0, 0, 1, 1], [], []>} : vector<128x32xbf16>, vector<32x32xbf16>, vector<128x32xf32> -> vector<128x32xf32>
    %c0_12 = arith.constant 0 : index
    %c0_13 = arith.constant 0 : index
    %15 = vector.load %arg7[%c0_12, %c0_13] : memref<1x32xf32, #tpu.memory_space<vmem>>, vector<1x32xf32>
    %16 = vector.broadcast %15 : vector<1x32xf32> to vector<128x32xf32>
    %17 = arith.addf %14, %16 : vector<128x32xf32>
    %cst_14 = arith.constant 0.000000e+00 : f32
    %18 = vector.broadcast %cst_14 : f32 to vector<128x32xf32>
    %19 = arith.maximumf %17, %18 : vector<128x32xf32>
    %20 = arith.truncf %19 : vector<128x32xf32> to vector<128x32xbf16>
    %c0_15 = arith.constant 0 : index
    %c0_16 = arith.constant 0 : index
    %21 = vector.load %arg8[%c0_15, %c0_16] : memref<32x128xbf16, #tpu.memory_space<vmem>>, vector<32x128xbf16>
    %cst_17 = arith.constant dense<0.000000e+00> : vector<128x128xf32>
    %22 = tpu.matmul %20, %21, %cst_17 {dimension_numbers = #tpu.dot_dimension_numbers<[1], [0], [0], [1], [0, 0, 1, 1], [], []>} : vector<128x32xbf16>, vector<32x128xbf16>, vector<128x128xf32> -> vector<128x128xf32>
    %c0_18 = arith.constant 0 : index
    %c0_19 = arith.constant 0 : index
    %23 = vector.load %arg9[%c0_18, %c0_19] : memref<1x128xf32, #tpu.memory_space<vmem>>, vector<1x128xf32>
    %24 = vector.broadcast %23 : vector<1x128xf32> to vector<128x128xf32>
    %25 = arith.addf %22, %24 : vector<128x128xf32>
    %26 = arith.extf %0 : vector<128x128xbf16> to vector<128x128xf32>
    %27 = arith.addf %25, %26 : vector<128x128xf32>
    %cst_20 = arith.constant 0.000000e+00 : f32
    %28 = vector.broadcast %cst_20 : f32 to vector<128x128xf32>
    %29 = arith.maximumf %27, %28 : vector<128x128xf32>
    %30 = arith.truncf %29 : vector<128x128xf32> to vector<128x128xbf16>
    %c0_21 = arith.constant 0 : index
    %c0_22 = arith.constant 0 : index
    %31 = vector.load %arg10[%c0_21, %c0_22] : memref<128x128xbf16, #tpu.memory_space<vmem>>, vector<128x128xbf16>
    tpu.vector_store %arg10[%c0_21, %c0_22], %30 {strides = array<i32>} : memref<128x128xbf16, #tpu.memory_space<vmem>>, vector<128x128xbf16>,
    return
  }
  func.func @transform_0(%arg0: i32, %arg1: i32) -> (i32, i32) {
    %c2_i32 = arith.constant 2 : i32
    %0 = arith.muli %arg0, %c2_i32 : i32
    %1 = arith.addi %0, %arg1 : i32
    %c0_i32 = arith.constant 0 : i32
    %c0_i32_0 = arith.constant 0 : i32
    return %1, %c0_i32 : i32, i32
  }
  func.func @transform_1(%arg0: i32, %arg1: i32) -> (i32, i32) {
    %c0_i32 = arith.constant 0 : i32
    %c0_i32_0 = arith.constant 0 : i32
    return %arg1, %c0_i32 : i32, i32
  }
  func.func @transform_2(%arg0: i32, %arg1: i32) -> (i32, i32) {
    %c0_i32 = arith.constant 0 : i32
    %c0_i32_0 = arith.constant 0 : i32
    %c0_i32_1 = arith.constant 0 : i32
    return %c0_i32, %c0_i32_0 : i32, i32
  }
  func.func @transform_3(%arg0: i32, %arg1: i32) -> (i32, i32) {
    %c0_i32 = arith.constant 0 : i32
    %c0_i32_0 = arith.constant 0 : i32
    %c0_i32_1 = arith.constant 0 : i32
    return %c0_i32, %c0_i32_0 : i32, i32
  }
  func.func @transform_4(%arg0: i32, %arg1: i32) -> (i32, i32) {
    %c0_i32 = arith.constant 0 : i32
    %c0_i32_0 = arith.constant 0 : i32
    %c0_i32_1 = arith.constant 0 : i32
    return %c0_i32, %c0_i32_0 : i32, i32
  }
  func.func @transform_5(%arg0: i32, %arg1: i32) -> (i32, i32) {
    %c0_i32 = arith.constant 0 : i32
    %c0_i32_0 = arith.constant 0 : i32
    %c0_i32_1 = arith.constant 0 : i32
    return %c0_i32, %c0_i32_0 : i32, i32
  }
  func.func @transform_6(%arg0: i32, %arg1: i32) -> (i32, i32) {
    %c0_i32 = arith.constant 0 : i32
    %c0_i32_0 = arith.constant 0 : i32
    %c0_i32_1 = arith.constant 0 : i32
    return %c0_i32, %c0_i32_0 : i32, i32
  }
  func.func @transform_7(%arg0: i32, %arg1: i32) -> (i32, i32) {
    %c0_i32 = arith.constant 0 : i32
    %c0_i32_0 = arith.constant 0 : i32
    %c0_i32_1 = arith.constant 0 : i32
    return %c0_i32, %c0_i32_0 : i32, i32
  }
  func.func @transform_8(%arg0: i32, %arg1: i32) -> (i32, i32) {
    %c2_i32 = arith.constant 2 : i32
    %0 = arith.muli %arg0, %c2_i32 : i32
    %1 = arith.addi %0, %arg1 : i32
    %c0_i32 = arith.constant 0 : i32
    %c0_i32_0 = arith.constant 0 : i32
    return %1, %c0_i32 : i32, i32
  }
}

</mosaic_0001>

<llo_original>
// kernel: tpu_custom_call.1
$region0: #{tpu_custom_call.1}
  #allocation0 [shape = 'u32[]', space=smem, size = 0x4, offset = 0x4, fixed_abs, tag = 'smem constant byte address 0x4 - core index']
  #allocation1 [shape = 'u32[144,128]{1,0:T(1,128)}', space=vmem, size = 0x12000, scoped, tag = 'internal scratch']
  %s0 = inlined_call_operand.vmem [shape: bf16[512,128], index: 0, kind: input, shape index: {}]
  %s1 = inlined_call_operand.vmem [shape: f32[256,32], index: 1, kind: input, shape index: {}]
  %s2 = inlined_call_operand.vmem [shape: bf16[128,32], index: 2, kind: input, shape index: {}]
  %s3 = inlined_call_operand.vmem [shape: f32[1,32], index: 3, kind: input, shape index: {}]
  %s4 = inlined_call_operand.vmem [shape: bf16[32,32], index: 4, kind: input, shape index: {}]
  %s5 = inlined_call_operand.vmem [shape: f32[1,32], index: 5, kind: input, shape index: {}]
  %s6 = inlined_call_operand.vmem [shape: bf16[32,128], index: 6, kind: input, shape index: {}]
  %s7 = inlined_call_operand.vmem [shape: f32[1,128], index: 7, kind: input, shape index: {}]
  %s8 = inlined_call_operand.hbm [shape: bf16[512,128], index: 8, kind: output, shape index: {}]
  %s9 = sld [smem:[#allocation0]]
  $region65: #{tpu_custom_call.1} parent=0
    _
  %s11 = ssub.s32 1, %s9
  %s12 = scalar_select 0, %s11, %s9
  $region1: #{tpu_custom_call.1} parent=0
    #allocation2 [shape = 'u8[65536]{0}', space=vmem, size = 0x10000, scoped, tag = 'output window, operand 0']
    #allocation3 [shape = 's32[2]{0}', space=sflag, size = 0x8, scoped, tag = 'scoped memory for tpu_custom_call.1']
    %13 = vsyncpa [#allocation3], 0
    %s14 = scalar_lea.sflag [#allocation3], 1
    %15 = vsyncpa %s14, 0
    loop: start=0, step=1, limit=6
    $region2: #{tpu_custom_call.1} parent=1 // loop_pre_header
      _
    $region3: #{tpu_custom_call.1} parent=1 // loop_header
      %s17 = sphi 0, %s21
      %p18 = scmp.ge.s32.totalorder %s17, 6
      %s24 = sphi 0, %s36
      %s25 = sphi 0, %s32
      %s26 = sphi 0, %s24
      %s27 = sphi 0, %s25
      %s28 = sphi 0, %s26
      %s29 = sphi 0, %s27
      %s43 = sphi 0, %s45
      %s46 = sphi 0, %s43
      %s47 = sphi 0, %s46
      %s63 = sphi 0, %s47
      %s69 = sphi 0, %s71
      %s72 = sphi 0, %s69
      %s73 = sphi 0, %s72
      %s89 = sphi 0, %s73
      %s93 = sphi 0, %s93
      %s95 = sphi 0, %s93
      %s96 = sphi 0, %s95
      %s110 = sphi 0, %s96
      %s114 = sphi 0, %s114
      %s116 = sphi 0, %s114
      %s117 = sphi 0, %s116
      %s131 = sphi 0, %s117
      %s135 = sphi 0, %s135
      %s137 = sphi 0, %s135
      %s138 = sphi 0, %s137
      %s152 = sphi 0, %s138
      %s156 = sphi 0, %s156
      %s158 = sphi 0, %s156
      %s159 = sphi 0, %s158
      %s173 = sphi 0, %s159
      %s177 = sphi 0, %s177
      %s179 = sphi 0, %s177
      %s180 = sphi 0, %s179
      %s194 = sphi 0, %s180
      %s198 = sphi 0, %s198
      %s200 = sphi 0, %s198
      %s201 = sphi 0, %s200
      %s215 = sphi 0, %s201
      %s225 = sphi 0, %s227
      %s228 = sphi 0, %s225
      %s229 = sphi 0, %s228
      %s245 = sphi 0, %s229
    $region4: #{tpu_custom_call.1} parent=1 // loop_header_branch
      %20 = sbr.rel (%p18) target = $region8
    $region5: #{tpu_custom_call.1} parent=1 // loop_body
      %s22 = ssub.s32 %s17, 1
      %s23 = ssub.s32 %s17, 2
      %s30 = sadd.s32 1, %s25
      %p31 = scmp.ge.s32.totalorder %s30, 2
      %s32 = scalar_select %p31, 0, %s30
      %s33 = sadd.s32 1, %s24
      %s34 = scalar_select %p31, %s33, %s24
      %p35 = scmp.ge.s32.totalorder %s34, 2
      %s36 = scalar_select %p35, 0, %s34
      %s37 = smul.u32 %s24, 2
      %s38 = sadd.s32 %s37, %s25
      %s39 = smul.u32 %s36, 2
      %s40 = sadd.s32 %s39, %s32
      %s41 = ssub.s32 %s38, %s40
      %p42 = scmp.eq.s32.totalorder %s41, 0
      %s44 = sadd.s32 %s43, 1
      %s45 = scalar_select %p42, %s43, %s44
      %p48 = pneg %p42
      %p49 = scmp.eq.s32.totalorder %s17, 3
      %p50 = por %p48, %p49
      %p51 = scmp.ne.s32.totalorder %s43, %s46
      %p52 = scmp.eq.s32.totalorder %s17, 0
      %p53 = por %p51, %p52
      %p54 = scmp.ne.s32.totalorder %s43, %s46
      %p55 = scmp.eq.s32.totalorder %s22, 3
      %p56 = por %p54, %p55
      %p57 = scmp.ne.s32.totalorder %s46, %s47
      %p58 = scmp.eq.s32.totalorder %s22, 0
      %p59 = por %p57, %p58
      %p60 = scmp.ne.s32.totalorder %s46, %s47
      %p61 = scmp.eq.s32.totalorder %s23, 3
      %p62 = por %p60, %p61
      %p64 = scmp.ne.s32.totalorder %s47, %s63
      %p65 = scmp.eq.s32.totalorder %s23, 0
      %p66 = por %p64, %p65
      %s67 = ssub.s32 %s25, %s32
      %p68 = scmp.eq.s32.totalorder %s67, 0
      %s70 = sadd.s32 %s69, 1
      %s71 = scalar_select %p68, %s69, %s70
      %p74 = pneg %p68
      %p75 = scmp.eq.s32.totalorder %s17, 3
      %p76 = por %p74, %p75
      %p77 = scmp.ne.s32.totalorder %s69, %s72
      %p78 = scmp.eq.s32.totalorder %s17, 0
      %p79 = por %p77, %p78
      %p80 = scmp.ne.s32.totalorder %s69, %s72
      %p81 = scmp.eq.s32.totalorder %s22, 3
      %p82 = por %p80, %p81
      %p83 = scmp.ne.s32.totalorder %s72, %s73
      %p84 = scmp.eq.s32.totalorder %s22, 0
      %p85 = por %p83, %p84
      %p86 = scmp.ne.s32.totalorder %s72, %s73
      %p87 = scmp.eq.s32.totalorder %s23, 3
      %p88 = por %p86, %p87
      %p90 = scmp.ne.s32.totalorder %s73, %s89
      %p91 = scmp.eq.s32.totalorder %s23, 0
      %p92 = por %p90, %p91
      %s94 = sadd.s32 %s93, 1
      %p97 = scmp.eq.s32.totalorder %s17, 3
      %p98 = scmp.ne.s32.totalorder %s93, %s95
      %p99 = scmp.eq.s32.totalorder %s17, 0
      %p100 = por %p98, %p99
      %p101 = scmp.ne.s32.totalorder %s93, %s95
      %p102 = scmp.eq.s32.totalorder %s22, 3
      %p103 = por %p101, %p102
      %p104 = scmp.ne.s32.totalorder %s95, %s96
      %p105 = scmp.eq.s32.totalorder %s22, 0
      %p106 = por %p104, %p105
      %p107 = scmp.ne.s32.totalorder %s95, %s96
      %p108 = scmp.eq.s32.totalorder %s23, 3
      %p109 = por %p107, %p108
      %p111 = scmp.ne.s32.totalorder %s96, %s110
      %p112 = scmp.eq.s32.totalorder %s23, 0
      %p113 = por %p111, %p112
      %s115 = sadd.s32 %s114, 1
      %p118 = scmp.eq.s32.totalorder %s17, 3
      %p119 = scmp.ne.s32.totalorder %s114, %s116
      %p120 = scmp.eq.s32.totalorder %s17, 0
      %p121 = por %p119, %p120
      %p122 = scmp.ne.s32.totalorder %s114, %s116
      %p123 = scmp.eq.s32.totalorder %s22, 3
      %p124 = por %p122, %p123
      %p125 = scmp.ne.s32.totalorder %s116, %s117
      %p126 = scmp.eq.s32.totalorder %s22, 0
      %p127 = por %p125, %p126
      %p128 = scmp.ne.s32.totalorder %s116, %s117
      %p129 = scmp.eq.s32.totalorder %s23, 3
      %p130 = por %p128, %p129
      %p132 = scmp.ne.s32.totalorder %s117, %s131
      %p133 = scmp.eq.s32.totalorder %s23, 0
      %p134 = por %p132, %p133
      %s136 = sadd.s32 %s135, 1
      %p139 = scmp.eq.s32.totalorder %s17, 3
      %p140 = scmp.ne.s32.totalorder %s135, %s137
      %p141 = scmp.eq.s32.totalorder %s17, 0
      %p142 = por %p140, %p141
      %p143 = scmp.ne.s32.totalorder %s135, %s137
      %p144 = scmp.eq.s32.totalorder %s22, 3
      %p145 = por %p143, %p144
      %p146 = scmp.ne.s32.totalorder %s137, %s138
      %p147 = scmp.eq.s32.totalorder %s22, 0
      %p148 = por %p146, %p147
      %p149 = scmp.ne.s32.totalorder %s137, %s138
      %p150 = scmp.eq.s32.totalorder %s23, 3
      %p151 = por %p149, %p150
      %p153 = scmp.ne.s32.totalorder %s138, %s152
      %p154 = scmp.eq.s32.totalorder %s23, 0
      %p155 = por %p153, %p154
      %s157 = sadd.s32 %s156, 1
      %p160 = scmp.eq.s32.totalorder %s17, 3
      %p161 = scmp.ne.s32.totalorder %s156, %s158
      %p162 = scmp.eq.s32.totalorder %s17, 0
      %p163 = por %p161, %p162
      %p164 = scmp.ne.s32.totalorder %s156, %s158
      %p165 = scmp.eq.s32.totalorder %s22, 3
      %p166 = por %p164, %p165
      %p167 = scmp.ne.s32.totalorder %s158, %s159
      %p168 = scmp.eq.s32.totalorder %s22, 0
      %p169 = por %p167, %p168
      %p170 = scmp.ne.s32.totalorder %s158, %s159
      %p171 = scmp.eq.s32.totalorder %s23, 3
      %p172 = por %p170, %p171
      %p174 = scmp.ne.s32.totalorder %s159, %s173
      %p175 = scmp.eq.s32.totalorder %s23, 0
      %p176 = por %p174, %p175
      %s178 = sadd.s32 %s177, 1
      %p181 = scmp.eq.s32.totalorder %s17, 3
      %p182 = scmp.ne.s32.totalorder %s177, %s179
      %p183 = scmp.eq.s32.totalorder %s17, 0
      %p184 = por %p182, %p183
      %p185 = scmp.ne.s32.totalorder %s177, %s179
      %p186 = scmp.eq.s32.totalorder %s22, 3
      %p187 = por %p185, %p186
      %p188 = scmp.ne.s32.totalorder %s179, %s180
      %p189 = scmp.eq.s32.totalorder %s22, 0
      %p190 = por %p188, %p189
      %p191 = scmp.ne.s32.totalorder %s179, %s180
      %p192 = scmp.eq.s32.totalorder %s23, 3
      %p193 = por %p191, %p192
      %p195 = scmp.ne.s32.totalorder %s180, %s194
      %p196 = scmp.eq.s32.totalorder %s23, 0
      %p197 = por %p195, %p196
      %s199 = sadd.s32 %s198, 1
      %p202 = scmp.eq.s32.totalorder %s17, 3
      %p203 = scmp.ne.s32.totalorder %s198, %s200
      %p204 = scmp.eq.s32.totalorder %s17, 0
      %p205 = por %p203, %p204
      %p206 = scmp.ne.s32.totalorder %s198, %s200
      %p207 = scmp.eq.s32.totalorder %s22, 3
      %p208 = por %p206, %p207
      %p209 = scmp.ne.s32.totalorder %s200, %s201
      %p210 = scmp.eq.s32.totalorder %s22, 0
      %p211 = por %p209, %p210
      %p212 = scmp.ne.s32.totalorder %s200, %s201
      %p213 = scmp.eq.s32.totalorder %s23, 3
      %p214 = por %p212, %p213
      %p216 = scmp.ne.s32.totalorder %s201, %s215
      %p217 = scmp.eq.s32.totalorder %s23, 0
      %p218 = por %p216, %p217
      %s219 = smul.u32 %s24, 2
      %s220 = sadd.s32 %s219, %s25
      %s221 = smul.u32 %s36, 2
      %s222 = sadd.s32 %s221, %s32
      %s223 = ssub.s32 %s220, %s222
      %p224 = scmp.eq.s32.totalorder %s223, 0
      %s226 = sadd.s32 %s225, 1
      %s227 = scalar_select %p224, %s225, %s226
      %p230 = pneg %p224
      %p231 = scmp.eq.s32.totalorder %s17, 3
      %p232 = por %p230, %p231
      %p233 = scmp.ne.s32.totalorder %s225, %s228
      %p234 = scmp.eq.s32.totalorder %s17, 0
      %p235 = por %p233, %p234
      %p236 = scmp.ne.s32.totalorder %s225, %s228
      %p237 = scmp.eq.s32.totalorder %s22, 3
      %p238 = por %p236, %p237
      %p239 = scmp.ne.s32.totalorder %s228, %s229
      %p240 = scmp.eq.s32.totalorder %s22, 0
      %p241 = por %p239, %p240
      %p242 = scmp.ne.s32.totalorder %s228, %s229
      %p243 = scmp.eq.s32.totalorder %s23, 3
      %p244 = por %p242, %p243
      %p246 = scmp.ne.s32.totalorder %s229, %s245
      %p247 = scmp.eq.s32.totalorder %s23, 0
      %p248 = por %p246, %p247
      %p249 = scmp.le.s32.totalorder 1, %s17
      %p250 = scmp.lt.s32.totalorder %s17, 5
      %p251 = pnand %p249, %p250
      %p252 = pneg %p251
      // Predicated region
      $region9: #{tpu_custom_call.1} parent=5 // pred_check
        _
      $region10: #{tpu_custom_call.1} parent=5 // pred_check_branch
        %254 = sbr.rel (%p251) target = $region12
      $region11: #{tpu_custom_call.1} parent=5 // pred_region
        %s255 = ssub.s32 %s17, 1
        // Predicated region
        $region13: #{tpu_custom_call.1} parent=11 // pred_check
          %p256 = pneg %p106
        $region14: #{tpu_custom_call.1} parent=11 // pred_check_branch
          %258 = sbr.rel (%p256) target = $region16
        $region15: #{tpu_custom_call.1} parent=11 // pred_region
          _
        $region16: #{tpu_custom_call.1} parent=11 // pred_fallthru
          _
        // Predicated region
        $region17: #{tpu_custom_call.1} parent=11 // pred_check
          %p259 = pneg %p127
        $region18: #{tpu_custom_call.1} parent=11 // pred_check_branch
          %261 = sbr.rel (%p259) target = $region20
        $region19: #{tpu_custom_call.1} parent=11 // pred_region
          _
        $region20: #{tpu_custom_call.1} parent=11 // pred_fallthru
          _
        // Predicated region
        $region21: #{tpu_custom_call.1} parent=11 // pred_check
          %p262 = pneg %p148
        $region22: #{tpu_custom_call.1} parent=11 // pred_check_branch
          %264 = sbr.rel (%p262) target = $region24
        $region23: #{tpu_custom_call.1} parent=11 // pred_region
          _
        $region24: #{tpu_custom_call.1} parent=11 // pred_fallthru
          _
        // Predicated region
        $region25: #{tpu_custom_call.1} parent=11 // pred_check
          %p265 = pneg %p169
        $region26: #{tpu_custom_call.1} parent=11 // pred_check_branch
          %267 = sbr.rel (%p265) target = $region28
        $region27: #{tpu_custom_call.1} parent=11 // pred_region
          _
        $region28: #{tpu_custom_call.1} parent=11 // pred_fallthru
          _
        // Predicated region
        $region29: #{tpu_custom_call.1} parent=11 // pred_check
          %p268 = pneg %p190
        $region30: #{tpu_custom_call.1} parent=11 // pred_check_branch
          %270 = sbr.rel (%p268) target = $region32
        $region31: #{tpu_custom_call.1} parent=11 // pred_region
          _
        $region32: #{tpu_custom_call.1} parent=11 // pred_fallthru
          _
        // Predicated region
        $region33: #{tpu_custom_call.1} parent=11 // pred_check
          %p271 = pneg %p211
        $region34: #{tpu_custom_call.1} parent=11 // pred_check_branch
          %273 = sbr.rel (%p271) target = $region36
        $region35: #{tpu_custom_call.1} parent=11 // pred_region
          _
        $region36: #{tpu_custom_call.1} parent=11 // pred_fallthru
          _
      $region12: #{tpu_custom_call.1} parent=5 // pred_fallthru
        _
      %p274 = scmp.lt.s32.totalorder %s17, 4
      // Predicated region
      $region37: #{tpu_custom_call.1} parent=5 // pred_check
        %p275 = pneg %p274
      $region38: #{tpu_custom_call.1} parent=5 // pred_check_branch
        %277 = sbr.rel (%p275) target = $region40
      $region39: #{tpu_custom_call.1} parent=5 // pred_region
        // Predicated region
        $region41: #{tpu_custom_call.1} parent=39 // pred_check
          %p278 = pneg %p53
        $region42: #{tpu_custom_call.1} parent=39 // pred_check_branch
          %280 = sbr.rel (%p278) target = $region44
        $region43: #{tpu_custom_call.1} parent=39 // pred_region
          %s281 = smul.u32 %s24, 2
          %s282 = sadd.s32 %s281, %s25
          %s283 = smul.u32 16, %s282
          %p284 = scmp.lt.s32.totalorder %s283, 63
          %s285 = scalar_select %p284, %s283, 63
          %s286 = smul.addr %s285, 4
          %s287 = scalar_lea.vmem %s0, %s286
          %s288 = smul.u32 %s24, 2
          %s289 = sadd.s32 %s288, %s25
          %s290 = smul.u32 16, %s289
        $region44: #{tpu_custom_call.1} parent=39 // pred_fallthru
          _
        // Predicated region
        $region45: #{tpu_custom_call.1} parent=39 // pred_check
          %p291 = pneg %p79
        $region46: #{tpu_custom_call.1} parent=39 // pred_check_branch
          %293 = sbr.rel (%p291) target = $region48
        $region47: #{tpu_custom_call.1} parent=39 // pred_region
          %s294 = smul.u32 16, %s25
          %p295 = scmp.lt.s32.totalorder %s294, 31
          %s296 = scalar_select %p295, %s294, 31
          %s297 = smul.addr %s296, 8
          %s298 = scalar_lea.vmem %s1, %s297
          %s299 = smul.u32 16, %s25
        $region48: #{tpu_custom_call.1} parent=39 // pred_fallthru
          _
      $region40: #{tpu_custom_call.1} parent=5 // pred_fallthru
        _
      %p300 = scmp.le.s32.totalorder 1, %s17
      %p301 = scmp.lt.s32.totalorder %s17, 5
      %p302 = pnand %p300, %p301
      %p303 = pneg %p302
      // Predicated region
      $region49: #{tpu_custom_call.1} parent=5 // pred_check
        _
      $region50: #{tpu_custom_call.1} parent=5 // pred_check_branch
        %305 = sbr.rel (%p302) target = $region52
      $region51: #{tpu_custom_call.1} parent=5 // pred_region
        %s306 = ssub.s32 %s17, 1
        %s307 = smul.u32 %s26, 2
        %s308 = sadd.s32 %s307, %s27
        %s309 = smul.u32 16, %s308
        %p310 = scmp.lt.s32.totalorder %s309, 63
        %s311 = scalar_select %p310, %s309, 63
        %s312 = smul.addr %s311, 4
        %s313 = scalar_lea.vmem %s0, %s312
        %p314 = pneg %p59
        %p315 = pneg %p56
        %s316 = smul.u32 16, %s27
        %p317 = scmp.lt.s32.totalorder %s316, 31
        %s318 = scalar_select %p317, %s316, 31
        %s319 = smul.addr %s318, 8
        %s320 = scalar_lea.vmem %s1, %s319
        %p321 = pneg %p85
        %p322 = pneg %p82
        %p323 = pneg %p106
        %p324 = pneg %p103
        %p325 = pneg %p127
        %p326 = pneg %p124
        %p327 = pneg %p148
        %p328 = pneg %p145
        %p329 = pneg %p169
        %p330 = pneg %p166
        %p331 = pneg %p190
        %p332 = pneg %p187
        %p333 = pneg %p211
        %p334 = pneg %p208
        %p335 = pneg %p241
        %p336 = pneg %p238
        %s337 = sand.u32 %s228, 1
        %s338 = scalar_lea.sflag [#allocation3], %s337
        %s339 = sand.u32 %s228, 1
        %s340 = smul.addr %s339, 64
        %s341 = scalar_lea.vmem [#allocation2], %s340
        %s342 = smul.u32 %s26, 2
        %s343 = sadd.s32 %s342, %s27
        %s344 = smul.u32 16, %s343
        %p345 = scmp.lt.s32.totalorder %s344, 63
        %s346 = scalar_select %p345, %s344, 63
        %s347 = smul.addr %s346, 4
        %s348 = scalar_lea.vmem %s0, %s347
        %s349 = smul.u32 %s26, 2
        %s350 = sadd.s32 %s349, %s27
        %s351 = smul.u32 16, %s350
        %s352 = smul.u32 16, %s27
        %p353 = scmp.lt.s32.totalorder %s352, 31
        %s354 = scalar_select %p353, %s352, 31
        %s355 = smul.addr %s354, 8
        %s356 = scalar_lea.vmem %s1, %s355
        %s357 = smul.u32 16, %s27
        %s358 = smul.u32 %s26, 2
        %s359 = sadd.s32 %s358, %s27
        %s360 = smul.u32 16, %s359
        %v362 = vld [vmem:[%s348] sm:$0xf]
        %v363 = vld [vmem:[%s348 + $0x4] sm:$0xf]
        %v364 = vld [vmem:[%s348 + $0x8] sm:$0xf]
        %v365 = vld [vmem:[%s348 + $0xc] sm:$0xf]
        %v366 = vld [vmem:[%s348 + $0x10] sm:$0xf]
        %v367 = vld [vmem:[%s348 + $0x14] sm:$0xf]
        %v368 = vld [vmem:[%s348 + $0x18] sm:$0xf]
        %v369 = vld [vmem:[%s348 + $0x1c] sm:$0xf]
        %v370 = vld [vmem:[%s348 + $0x20] sm:$0xf]
        %v371 = vld [vmem:[%s348 + $0x24] sm:$0xf]
        %v372 = vld [vmem:[%s348 + $0x28] sm:$0xf]
        %v373 = vld [vmem:[%s348 + $0x2c] sm:$0xf]
        %v374 = vld [vmem:[%s348 + $0x30] sm:$0xf]
        %v375 = vld [vmem:[%s348 + $0x34] sm:$0xf]
        %v376 = vld [vmem:[%s348 + $0x38] sm:$0xf]
        %v377 = vld [vmem:[%s348 + $0x3c] sm:$0xf]
        %v378 = vld [vmem:[%s2] sm:$0xf]
        %v379 = vld [vmem:[%s2 + $0x4] sm:$0xf]
        %v380 = vld [vmem:[%s2 + $0x8] sm:$0xf]
        %v381 = vld [vmem:[%s2 + $0xc] sm:$0xf]
        %v382 = vld [vmem:[%s2 + $0x10] sm:$0xf]
        %v383 = vld [vmem:[%s2 + $0x14] sm:$0xf]
        %v384 = vld [vmem:[%s2 + $0x18] sm:$0xf]
        %v385 = vld [vmem:[%s2 + $0x1c] sm:$0xf]
        %v386 = vld [vmem:[%s2 + $0x20] sm:$0xf]
        %v387 = vld [vmem:[%s2 + $0x24] sm:$0xf]
        %v388 = vld [vmem:[%s2 + $0x28] sm:$0xf]
        %v389 = vld [vmem:[%s2 + $0x2c] sm:$0xf]
        %v390 = vld [vmem:[%s2 + $0x30] sm:$0xf]
        %v391 = vld [vmem:[%s2 + $0x34] sm:$0xf]
        %v392 = vld [vmem:[%s2 + $0x38] sm:$0xf]
        %v393 = vld [vmem:[%s2 + $0x3c] sm:$0xf]
        %v394 = vld [vmem:[%s3] sm:$0x1]
        %v396 = vlaneseq
        %v397 = vshrl.u32 %v396, 7
        %v398 = vsub.s32 0, %v397
        %v399 = vrot.slane %v394, %v398
        %v417 = vunpack.c.l.b16 %v362
        %v418 = vunpack.c.l.b16 %v363
        %v419 = vunpack.c.l.b16 %v364
        %v420 = vunpack.c.l.b16 %v365
        %v421 = vunpack.c.l.b16 %v366
        %v422 = vunpack.c.l.b16 %v367
        %v423 = vunpack.c.l.b16 %v368
        %v424 = vunpack.c.l.b16 %v369
        %v425 = vunpack.c.l.b16 %v370
        %v426 = vunpack.c.l.b16 %v371
        %v427 = vunpack.c.l.b16 %v372
        %v428 = vunpack.c.l.b16 %v373
        %v429 = vunpack.c.l.b16 %v374
        %v430 = vunpack.c.l.b16 %v375
        %v431 = vunpack.c.l.b16 %v376
        %v432 = vunpack.c.l.b16 %v377
        %v433 = vpack.c.b16 %v418, %v417
        %v434 = vpack.c.b16 %v420, %v419
        %v435 = vpack.c.b16 %v422, %v421
        %v436 = vpack.c.b16 %v424, %v423
        %v437 = vpack.c.b16 %v426, %v425
        %v438 = vpack.c.b16 %v428, %v427
        %v439 = vpack.c.b16 %v430, %v429
        %v440 = vpack.c.b16 %v432, %v431
        %v465 = vunpack.c.l.b16 %v378
        %v466 = vunpack.c.l.b16 %v379
        %v467 = vunpack.c.l.b16 %v380
        %v468 = vunpack.c.l.b16 %v381
        %v469 = vunpack.c.l.b16 %v382
        %v470 = vunpack.c.l.b16 %v383
        %v471 = vunpack.c.l.b16 %v384
        %v472 = vunpack.c.l.b16 %v385
        %v473 = vunpack.c.l.b16 %v386
        %v474 = vunpack.c.l.b16 %v387
        %v475 = vunpack.c.l.b16 %v388
        %v476 = vunpack.c.l.b16 %v389
        %v477 = vunpack.c.l.b16 %v390
        %v478 = vunpack.c.l.b16 %v391
        %v479 = vunpack.c.l.b16 %v392
        %v480 = vunpack.c.l.b16 %v393
        %v481 = vpack.c.b16 %v466, %v465
        %v482 = vpack.c.b16 %v468, %v467
        %v483 = vpack.c.b16 %v470, %v469
        %v484 = vpack.c.b16 %v472, %v471
        %v485 = vpack.c.b16 %v474, %v473
        %v486 = vpack.c.b16 %v476, %v475
        %v487 = vpack.c.b16 %v478, %v477
        %v488 = vpack.c.b16 %v480, %v479
        %497 = vmatprep.subr.bf16.mxu0 0
        %498 = vmatpush1.bf16.msra.mxu0 %v488
        %499 = vmatprep.subr.bf16.mxu0 0
        %500 = vmatpush1.bf16.msra.mxu0 %v487
        %501 = vmatprep.subr.bf16.mxu0 0
        %502 = vmatpush1.bf16.msra.mxu0 %v486
        %503 = vmatprep.subr.bf16.mxu0 0
        %504 = vmatpush1.bf16.msra.mxu0 %v485
        %505 = vmatprep.subr.bf16.mxu0 0
        %506 = vmatpush1.bf16.msra.mxu0 %v484
        %507 = vmatprep.subr.bf16.mxu0 0
        %508 = vmatpush1.bf16.msra.mxu0 %v483
        %509 = vmatprep.subr.bf16.mxu0 0
        %510 = vmatpush1.bf16.msra.mxu0 %v482
        %511 = vmatprep.subr.bf16.mxu0 0
        %512 = vmatpush1.bf16.msra.mxu0 %v481
        %513 = vmatprep.subr.bf16.mxu0 0
        %514 = vmatpush2.bf16.msra.mxu0 0
        %515 = vmatprep.subr.bf16.mxu0 0
        %516 = vmatpush2.bf16.msra.mxu0 0
        %517 = vmatprep.subr.bf16.mxu0 0
        %518 = vmatpush2.bf16.msra.mxu0 0
        %519 = vmatprep.subr.bf16.mxu0 0
        %520 = vmatpush2.bf16.msra.mxu0 0
        %521 = vmatprep.subr.bf16.mxu0 0
        %522 = vmatpush2.bf16.msra.mxu0 0
        %523 = vmatprep.subr.bf16.mxu0 0
        %524 = vmatpush2.bf16.msra.mxu0 0
        %525 = vmatprep.subr.bf16.mxu0 0
        %526 = vmatpush2.bf16.msra.mxu0 0
        %527 = vmatprep.subr.bf16.mxu0 0
        %528 = vmatpush2.bf16.msra.mxu0 0
        %529 = vmatprep.mubr.bf16.mxu0 0
        %530 = vmatmul.mubr.bf16.gmra.mxu0 %v433
        %v531 = vpop.f32.mrf.mxu0
        %v532 = vadd.f32 %v399, %v531
        %v533 = vpop.f32.mrf.mxu0
        %v534 = vpop.f32.mrf.mxu0
        %v535 = vadd.f32 %v399, %v534
        %v536 = vpop.f32.mrf.mxu0
        %537 = vmatprep.mubr.bf16.mxu0 0
        %538 = vmatmul.mubr.bf16.gmra.mxu0 %v434
        %v539 = vpop.f32.mrf.mxu0
        %v540 = vadd.f32 %v399, %v539
        %v541 = vpop.f32.mrf.mxu0
        %v542 = vpop.f32.mrf.mxu0
        %v543 = vadd.f32 %v399, %v542
        %v544 = vpop.f32.mrf.mxu0
        %545 = vmatprep.mubr.bf16.mxu0 0
        %546 = vmatmul.mubr.bf16.gmra.mxu0 %v435
        %v547 = vpop.f32.mrf.mxu0
        %v548 = vadd.f32 %v399, %v547
        %v549 = vpop.f32.mrf.mxu0
        %v550 = vpop.f32.mrf.mxu0
        %v551 = vadd.f32 %v399, %v550
        %v552 = vpop.f32.mrf.mxu0
        %553 = vmatprep.mubr.bf16.mxu0 0
        %554 = vmatmul.mubr.bf16.gmra.mxu0 %v436
        %v555 = vpop.f32.mrf.mxu0
        %v556 = vadd.f32 %v399, %v555
        %v557 = vpop.f32.mrf.mxu0
        %v558 = vpop.f32.mrf.mxu0
        %v559 = vadd.f32 %v399, %v558
        %v560 = vpop.f32.mrf.mxu0
        %561 = vmatprep.mubr.bf16.mxu0 0
        %562 = vmatmul.mubr.bf16.gmra.mxu0 %v437
        %v563 = vpop.f32.mrf.mxu0
        %v564 = vadd.f32 %v399, %v563
        %v565 = vpop.f32.mrf.mxu0
        %v566 = vpop.f32.mrf.mxu0
        %v567 = vadd.f32 %v399, %v566
        %v568 = vpop.f32.mrf.mxu0
        %569 = vmatprep.mubr.bf16.mxu0 0
        %570 = vmatmul.mubr.bf16.gmra.mxu0 %v438
        %v571 = vpop.f32.mrf.mxu0
        %v572 = vadd.f32 %v399, %v571
        %v573 = vpop.f32.mrf.mxu0
        %v574 = vpop.f32.mrf.mxu0
        %v575 = vadd.f32 %v399, %v574
        %v576 = vpop.f32.mrf.mxu0
        %577 = vmatprep.mubr.bf16.mxu0 0
        %578 = vmatmul.mubr.bf16.gmra.mxu0 %v439
        %v579 = vpop.f32.mrf.mxu0
        %v580 = vadd.f32 %v399, %v579
        %v581 = vpop.f32.mrf.mxu0
        %v582 = vpop.f32.mrf.mxu0
        %v583 = vadd.f32 %v399, %v582
        %v584 = vpop.f32.mrf.mxu0
        %585 = vmatprep.mubr.bf16.mxu0 0
        %586 = vmatmul.mubr.bf16.gmra.mxu0 %v440
        %v587 = vpop.f32.mrf.mxu0
        %v588 = vadd.f32 %v399, %v587
        %v589 = vpop.f32.mrf.mxu0
        %v590 = vpop.f32.mrf.mxu0
        %v591 = vadd.f32 %v399, %v590
        %v592 = vpop.f32.mrf.mxu0
        %593 = vdwg.mxu0
        %v594 = vmax.f32 %v532, 0.0
        %v595 = vmax.f32 %v535, 0.0
        %v596 = vmax.f32 %v540, 0.0
        %v597 = vmax.f32 %v543, 0.0
        %v598 = vmax.f32 %v548, 0.0
        %v599 = vmax.f32 %v551, 0.0
        %v600 = vmax.f32 %v556, 0.0
        %v601 = vmax.f32 %v559, 0.0
        %v602 = vmax.f32 %v564, 0.0
        %v603 = vmax.f32 %v567, 0.0
        %v604 = vmax.f32 %v572, 0.0
        %v605 = vmax.f32 %v575, 0.0
        %v606 = vmax.f32 %v580, 0.0
        %v607 = vmax.f32 %v583, 0.0
        %v608 = vmax.f32 %v588, 0.0
        %v609 = vmax.f32 %v591, 0.0
        %v610 = vld [vmem:[%s356] sm:$0xff]
        %v611 = vld [vmem:[%s356 + $0x8] sm:$0xff]
        %v612 = vld [vmem:[%s356 + $0x10] sm:$0xff]
        %v613 = vld [vmem:[%s356 + $0x18] sm:$0xff]
        %v614 = vld [vmem:[%s356 + $0x20] sm:$0xff]
        %v615 = vld [vmem:[%s356 + $0x28] sm:$0xff]
        %v616 = vld [vmem:[%s356 + $0x30] sm:$0xff]
        %v617 = vld [vmem:[%s356 + $0x38] sm:$0xff]
        %v618 = vld [vmem:[%s356 + $0x40] sm:$0xff]
        %v619 = vld [vmem:[%s356 + $0x48] sm:$0xff]
        %v620 = vld [vmem:[%s356 + $0x50] sm:$0xff]
        %v621 = vld [vmem:[%s356 + $0x58] sm:$0xff]
        %v622 = vld [vmem:[%s356 + $0x60] sm:$0xff]
        %v623 = vld [vmem:[%s356 + $0x68] sm:$0xff]
        %v624 = vld [vmem:[%s356 + $0x70] sm:$0xff]
        %v625 = vld [vmem:[%s356 + $0x78] sm:$0xff]
        %v626 = vadd.f32 %v594, %v610
        %v627 = vadd.f32 %v595, %v611
        %v628 = vadd.f32 %v596, %v612
        %v629 = vadd.f32 %v597, %v613
        %v630 = vadd.f32 %v598, %v614
        %v631 = vadd.f32 %v599, %v615
        %v632 = vadd.f32 %v600, %v616
        %v633 = vadd.f32 %v601, %v617
        %v634 = vadd.f32 %v602, %v618
        %v635 = vadd.f32 %v603, %v619
        %v636 = vadd.f32 %v604, %v620
        %v637 = vadd.f32 %v605, %v621
        %v638 = vadd.f32 %v606, %v622
        %v639 = vadd.f32 %v607, %v623
        %v640 = vadd.f32 %v608, %v624
        %v641 = vadd.f32 %v609, %v625
        %v642 = vmax.f32 %v626, 0.0
        %v643 = vmax.f32 %v627, 0.0
        %v644 = vmax.f32 %v628, 0.0
        %v645 = vmax.f32 %v629, 0.0
        %v646 = vmax.f32 %v630, 0.0
        %v647 = vmax.f32 %v631, 0.0
        %v648 = vmax.f32 %v632, 0.0
        %v649 = vmax.f32 %v633, 0.0
        %v650 = vmax.f32 %v634, 0.0
        %v651 = vmax.f32 %v635, 0.0
        %v652 = vmax.f32 %v636, 0.0
        %v653 = vmax.f32 %v637, 0.0
        %v654 = vmax.f32 %v638, 0.0
        %v655 = vmax.f32 %v639, 0.0
        %v656 = vmax.f32 %v640, 0.0
        %v657 = vmax.f32 %v641, 0.0
        %v658 = vpack.c.bf16 %v643, %v642
        %v659 = vpack.c.bf16 %v645, %v644
        %v660 = vpack.c.bf16 %v647, %v646
        %v661 = vpack.c.bf16 %v649, %v648
        %v662 = vpack.c.bf16 %v651, %v650
        %v663 = vpack.c.bf16 %v653, %v652
        %v664 = vpack.c.bf16 %v655, %v654
        %v665 = vpack.c.bf16 %v657, %v656
        %v666 = vld [vmem:[%s4] sm:$0xf]
        %v667 = vld [vmem:[%s4 + $0x4] sm:$0xf]
        %v668 = vld [vmem:[%s4 + $0x8] sm:$0xf]
        %v669 = vld [vmem:[%s4 + $0xc] sm:$0xf]
        %v670 = vld [vmem:[%s5] sm:$0x1]
        %v672 = vlaneseq
        %v673 = vshrl.u32 %v672, 7
        %v674 = vsub.s32 0, %v673
        %v675 = vrot.slane %v670, %v674
        %v681 = vunpack.c.l.b16 %v666
        %v682 = vunpack.c.l.b16 %v667
        %v683 = vunpack.c.l.b16 %v668
        %v684 = vunpack.c.l.b16 %v669
        %v685 = vpack.c.b16 %v682, %v681
        %v686 = vpack.c.b16 %v684, %v683
        %vm689 = vcmask 261120
        %v691 = vsel %vm689, %v658, 0
        %v694 = vsel %vm689, %v659, 0
        %v697 = vsel %vm689, %v660, 0
        %v700 = vsel %vm689, %v661, 0
        %v703 = vsel %vm689, %v662, 0
        %v706 = vsel %vm689, %v663, 0
        %v709 = vsel %vm689, %v664, 0
        %v712 = vsel %vm689, %v665, 0
        %714 = vmatprep.subr.bf16.mxu0 0
        %715 = vmatpush1.bf16.msra.mxu0 0
        %716 = vmatprep.subr.bf16.mxu0 0
        %717 = vmatpush1.bf16.msra.mxu0 0
        %718 = vmatprep.subr.bf16.mxu0 0
        %719 = vmatpush1.bf16.msra.mxu0 0
        %720 = vmatprep.subr.bf16.mxu0 0
        %721 = vmatpush1.bf16.msra.mxu0 0
        %722 = vmatprep.subr.bf16.mxu0 0
        %723 = vmatpush1.bf16.msra.mxu0 0
        %724 = vmatprep.subr.bf16.mxu0 0
        %725 = vmatpush1.bf16.msra.mxu0 0
        %726 = vmatprep.subr.bf16.mxu0 0
        %727 = vmatpush1.bf16.msra.mxu0 %v686
        %728 = vmatprep.subr.bf16.mxu0 0
        %729 = vmatpush1.bf16.msra.mxu0 %v685
        %730 = vmatprep.subr.bf16.mxu0 0
        %731 = vmatpush2.bf16.msra.mxu0 0
        %732 = vmatprep.subr.bf16.mxu0 0
        %733 = vmatpush2.bf16.msra.mxu0 0
        %734 = vmatprep.subr.bf16.mxu0 0
        %735 = vmatpush2.bf16.msra.mxu0 0
        %736 = vmatprep.subr.bf16.mxu0 0
        %737 = vmatpush2.bf16.msra.mxu0 0
        %738 = vmatprep.subr.bf16.mxu0 0
        %739 = vmatpush2.bf16.msra.mxu0 0
        %740 = vmatprep.subr.bf16.mxu0 0
        %741 = vmatpush2.bf16.msra.mxu0 0
        %742 = vmatprep.subr.bf16.mxu0 0
        %743 = vmatpush2.bf16.msra.mxu0 0
        %744 = vmatprep.subr.bf16.mxu0 0
        %745 = vmatpush2.bf16.msra.mxu0 0
        %746 = vmatprep.mubr.bf16.mxu0 0
        %747 = vmatmul.mubr.bf16.gmra.mxu0 %v691
        %v748 = vpop.f32.mrf.mxu0
        %v749 = vadd.f32 %v675, %v748
        %v750 = vpop.f32.mrf.mxu0
        %v751 = vpop.f32.mrf.mxu0
        %v752 = vadd.f32 %v675, %v751
        %v753 = vpop.f32.mrf.mxu0
        %754 = vmatprep.mubr.bf16.mxu0 0
        %755 = vmatmul.mubr.bf16.gmra.mxu0 %v694
        %v756 = vpop.f32.mrf.mxu0
        %v757 = vadd.f32 %v675, %v756
        %v758 = vpop.f32.mrf.mxu0
        %v759 = vpop.f32.mrf.mxu0
        %v760 = vadd.f32 %v675, %v759
        %v761 = vpop.f32.mrf.mxu0
        %762 = vmatprep.mubr.bf16.mxu0 0
        %763 = vmatmul.mubr.bf16.gmra.mxu0 %v697
        %v764 = vpop.f32.mrf.mxu0
        %v765 = vadd.f32 %v675, %v764
        %v766 = vpop.f32.mrf.mxu0
        %v767 = vpop.f32.mrf.mxu0
        %v768 = vadd.f32 %v675, %v767
        %v769 = vpop.f32.mrf.mxu0
        %770 = vmatprep.mubr.bf16.mxu0 0
        %771 = vmatmul.mubr.bf16.gmra.mxu0 %v700
        %v772 = vpop.f32.mrf.mxu0
        %v773 = vadd.f32 %v675, %v772
        %v774 = vpop.f32.mrf.mxu0
        %v775 = vpop.f32.mrf.mxu0
        %v776 = vadd.f32 %v675, %v775
        %v777 = vpop.f32.mrf.mxu0
        %778 = vmatprep.mubr.bf16.mxu0 0
        %779 = vmatmul.mubr.bf16.gmra.mxu0 %v703
        %v780 = vpop.f32.mrf.mxu0
        %v781 = vadd.f32 %v675, %v780
        %v782 = vpop.f32.mrf.mxu0
        %v783 = vpop.f32.mrf.mxu0
        %v784 = vadd.f32 %v675, %v783
        %v785 = vpop.f32.mrf.mxu0
        %786 = vmatprep.mubr.bf16.mxu0 0
        %787 = vmatmul.mubr.bf16.gmra.mxu0 %v706
        %v788 = vpop.f32.mrf.mxu0
        %v789 = vadd.f32 %v675, %v788
        %v790 = vpop.f32.mrf.mxu0
        %v791 = vpop.f32.mrf.mxu0
        %v792 = vadd.f32 %v675, %v791
        %v793 = vpop.f32.mrf.mxu0
        %794 = vmatprep.mubr.bf16.mxu0 0
        %795 = vmatmul.mubr.bf16.gmra.mxu0 %v709
        %v796 = vpop.f32.mrf.mxu0
        %v797 = vadd.f32 %v675, %v796
        %v798 = vpop.f32.mrf.mxu0
        %v799 = vpop.f32.mrf.mxu0
        %v800 = vadd.f32 %v675, %v799
        %v801 = vpop.f32.mrf.mxu0
        %802 = vmatprep.mubr.bf16.mxu0 0
        %803 = vmatmul.mubr.bf16.gmra.mxu0 %v712
        %v804 = vpop.f32.mrf.mxu0
        %v805 = vadd.f32 %v675, %v804
        %v806 = vpop.f32.mrf.mxu0
        %v807 = vpop.f32.mrf.mxu0
        %v808 = vadd.f32 %v675, %v807
        %v809 = vpop.f32.mrf.mxu0
        %810 = vdwg.mxu0
        %v811 = vmax.f32 %v749, 0.0
        %v812 = vmax.f32 %v752, 0.0
        %v813 = vmax.f32 %v757, 0.0
        %v814 = vmax.f32 %v760, 0.0
        %v815 = vmax.f32 %v765, 0.0
        %v816 = vmax.f32 %v768, 0.0
        %v817 = vmax.f32 %v773, 0.0
        %v818 = vmax.f32 %v776, 0.0
        %v819 = vmax.f32 %v781, 0.0
        %v820 = vmax.f32 %v784, 0.0
        %v821 = vmax.f32 %v789, 0.0
        %v822 = vmax.f32 %v792, 0.0
        %v823 = vmax.f32 %v797, 0.0
        %v824 = vmax.f32 %v800, 0.0
        %v825 = vmax.f32 %v805, 0.0
        %v826 = vmax.f32 %v808, 0.0
        %v827 = vpack.c.bf16 %v812, %v811
        %v828 = vpack.c.bf16 %v814, %v813
        %v829 = vpack.c.bf16 %v816, %v815
        %v830 = vpack.c.bf16 %v818, %v817
        %v831 = vpack.c.bf16 %v820, %v819
        %v832 = vpack.c.bf16 %v822, %v821
        %v833 = vpack.c.bf16 %v824, %v823
        %v834 = vpack.c.bf16 %v826, %v825
        %v835 = vld [vmem:[%s6] sm:$0xf]
        %v836 = vld [vmem:[%s6 + $0x4] sm:$0xf]
        %v837 = vld [vmem:[%s6 + $0x8] sm:$0xf]
        %v838 = vld [vmem:[%s6 + $0xc] sm:$0xf]
        %v839 = vld [vmem:[%s7] sm:$0x1]
        %v841 = vlaneseq
        %v842 = vshrl.u32 %v841, 7
        %v843 = vsub.s32 0, %v842
        %v844 = vrot.slane %v839, %v843
        %v850 = vunpack.c.l.b16 %v835
        %v851 = vunpack.c.l.b16 %v836
        %v852 = vunpack.c.l.b16 %v837
        %v853 = vunpack.c.l.b16 %v838
        %v854 = vpack.c.b16 %v851, %v850
        %v855 = vpack.c.b16 %v853, %v852
        %v859 = vsel %vm689, %v827, 0
        %v862 = vsel %vm689, %v828, 0
        %v865 = vsel %vm689, %v829, 0
        %v868 = vsel %vm689, %v830, 0
        %v871 = vsel %vm689, %v831, 0
        %v874 = vsel %vm689, %v832, 0
        %v877 = vsel %vm689, %v833, 0
        %v880 = vsel %vm689, %v834, 0
        %882 = vmatprep.subr.bf16.mxu0 0
        %883 = vmatpush1.bf16.msra.mxu0 0
        %884 = vmatprep.subr.bf16.mxu0 0
        %885 = vmatpush1.bf16.msra.mxu0 0
        %886 = vmatprep.subr.bf16.mxu0 0
        %887 = vmatpush1.bf16.msra.mxu0 0
        %888 = vmatprep.subr.bf16.mxu0 0
        %889 = vmatpush1.bf16.msra.mxu0 0
        %890 = vmatprep.subr.bf16.mxu0 0
        %891 = vmatpush1.bf16.msra.mxu0 0
        %892 = vmatprep.subr.bf16.mxu0 0
        %893 = vmatpush1.bf16.msra.mxu0 0
        %894 = vmatprep.subr.bf16.mxu0 0
        %895 = vmatpush1.bf16.msra.mxu0 %v855
        %896 = vmatprep.subr.bf16.mxu0 0
        %897 = vmatpush1.bf16.msra.mxu0 %v854
        %898 = vmatprep.subr.bf16.mxu0 0
        %899 = vmatpush2.bf16.msra.mxu0 0
        %900 = vmatprep.subr.bf16.mxu0 0
        %901 = vmatpush2.bf16.msra.mxu0 0
        %902 = vmatprep.subr.bf16.mxu0 0
        %903 = vmatpush2.bf16.msra.mxu0 0
        %904 = vmatprep.subr.bf16.mxu0 0
        %905 = vmatpush2.bf16.msra.mxu0 0
        %906 = vmatprep.subr.bf16.mxu0 0
        %907 = vmatpush2.bf16.msra.mxu0 0
        %908 = vmatprep.subr.bf16.mxu0 0
        %909 = vmatpush2.bf16.msra.mxu0 0
        %910 = vmatprep.subr.bf16.mxu0 0
        %911 = vmatpush2.bf16.msra.mxu0 0
        %912 = vmatprep.subr.bf16.mxu0 0
        %913 = vmatpush2.bf16.msra.mxu0 0
        %914 = vmatprep.mubr.bf16.mxu0 0
        %915 = vmatmul.mubr.bf16.gmra.mxu0 %v859
        %v916 = vpop.f32.mrf.mxu0
        %v917 = vadd.f32 %v844, %v916
        %v918 = vpop.f32.mrf.mxu0
        %v919 = vpop.f32.mrf.mxu0
        %v920 = vadd.f32 %v844, %v919
        %v921 = vpop.f32.mrf.mxu0
        %922 = vmatprep.mubr.bf16.mxu0 0
        %923 = vmatmul.mubr.bf16.gmra.mxu0 %v862
        %v924 = vpop.f32.mrf.mxu0
        %v925 = vadd.f32 %v844, %v924
        %v926 = vpop.f32.mrf.mxu0
        %v927 = vpop.f32.mrf.mxu0
        %v928 = vadd.f32 %v844, %v927
        %v929 = vpop.f32.mrf.mxu0
        %930 = vmatprep.mubr.bf16.mxu0 0
        %931 = vmatmul.mubr.bf16.gmra.mxu0 %v865
        %v932 = vpop.f32.mrf.mxu0
        %v933 = vadd.f32 %v844, %v932
        %v934 = vpop.f32.mrf.mxu0
        %v935 = vpop.f32.mrf.mxu0
        %v936 = vadd.f32 %v844, %v935
        %v937 = vpop.f32.mrf.mxu0
        %938 = vmatprep.mubr.bf16.mxu0 0
        %939 = vmatmul.mubr.bf16.gmra.mxu0 %v868
        %v940 = vpop.f32.mrf.mxu0
        %v941 = vadd.f32 %v844, %v940
        %v942 = vpop.f32.mrf.mxu0
        %v943 = vpop.f32.mrf.mxu0
        %v944 = vadd.f32 %v844, %v943
        %v945 = vpop.f32.mrf.mxu0
        %946 = vmatprep.mubr.bf16.mxu0 0
        %947 = vmatmul.mubr.bf16.gmra.mxu0 %v871
        %v948 = vpop.f32.mrf.mxu0
        %v949 = vadd.f32 %v844, %v948
        %v950 = vpop.f32.mrf.mxu0
        %v951 = vpop.f32.mrf.mxu0
        %v952 = vadd.f32 %v844, %v951
        %v953 = vpop.f32.mrf.mxu0
        %954 = vmatprep.mubr.bf16.mxu0 0
        %955 = vmatmul.mubr.bf16.gmra.mxu0 %v874
        %v956 = vpop.f32.mrf.mxu0
        %v957 = vadd.f32 %v844, %v956
        %v958 = vpop.f32.mrf.mxu0
        %v959 = vpop.f32.mrf.mxu0
        %v960 = vadd.f32 %v844, %v959
        %v961 = vpop.f32.mrf.mxu0
        %962 = vmatprep.mubr.bf16.mxu0 0
        %963 = vmatmul.mubr.bf16.gmra.mxu0 %v877
        %v964 = vpop.f32.mrf.mxu0
        %v965 = vadd.f32 %v844, %v964
        %v966 = vpop.f32.mrf.mxu0
        %v967 = vpop.f32.mrf.mxu0
        %v968 = vadd.f32 %v844, %v967
        %v969 = vpop.f32.mrf.mxu0
        %970 = vmatprep.mubr.bf16.mxu0 0
        %971 = vmatmul.mubr.bf16.gmra.mxu0 %v880
        %v972 = vpop.f32.mrf.mxu0
        %v973 = vadd.f32 %v844, %v972
        %v974 = vpop.f32.mrf.mxu0
        %v975 = vpop.f32.mrf.mxu0
        %v976 = vadd.f32 %v844, %v975
        %v977 = vpop.f32.mrf.mxu0
        %978 = vdwg.mxu0
        %v979 = vunpack.c.l.bf16 %v362
        %v980 = vunpack.c.l.bf16 %v363
        %v981 = vunpack.c.l.bf16 %v364
        %v982 = vunpack.c.l.bf16 %v365
        %v983 = vunpack.c.l.bf16 %v366
        %v984 = vunpack.c.l.bf16 %v367
        %v985 = vunpack.c.l.bf16 %v368
        %v986 = vunpack.c.l.bf16 %v369
        %v987 = vunpack.c.l.bf16 %v370
        %v988 = vunpack.c.l.bf16 %v371
        %v989 = vunpack.c.l.bf16 %v372
        %v990 = vunpack.c.l.bf16 %v373
        %v991 = vunpack.c.l.bf16 %v374
        %v992 = vunpack.c.l.bf16 %v375
        %v993 = vunpack.c.l.bf16 %v376
        %v994 = vunpack.c.l.bf16 %v377
        %v995 = vadd.f32 %v917, %v979
        %v996 = vadd.f32 %v920, %v980
        %v997 = vadd.f32 %v925, %v981
        %v998 = vadd.f32 %v928, %v982
        %v999 = vadd.f32 %v933, %v983
        %v1000 = vadd.f32 %v936, %v984
        %v1001 = vadd.f32 %v941, %v985
        %v1002 = vadd.f32 %v944, %v986
        %v1003 = vadd.f32 %v949, %v987
        %v1004 = vadd.f32 %v952, %v988
        %v1005 = vadd.f32 %v957, %v989
        %v1006 = vadd.f32 %v960, %v990
        %v1007 = vadd.f32 %v965, %v991
        %v1008 = vadd.f32 %v968, %v992
        %v1009 = vadd.f32 %v973, %v993
        %v1010 = vadd.f32 %v976, %v994
        %v1011 = vmax.f32 %v995, 0.0
        %v1012 = vmax.f32 %v996, 0.0
        %v1013 = vmax.f32 %v997, 0.0
        %v1014 = vmax.f32 %v998, 0.0
        %v1015 = vmax.f32 %v999, 0.0
        %v1016 = vmax.f32 %v1000, 0.0
        %v1017 = vmax.f32 %v1001, 0.0
        %v1018 = vmax.f32 %v1002, 0.0
        %v1019 = vmax.f32 %v1003, 0.0
        %v1020 = vmax.f32 %v1004, 0.0
        %v1021 = vmax.f32 %v1005, 0.0
        %v1022 = vmax.f32 %v1006, 0.0
        %v1023 = vmax.f32 %v1007, 0.0
        %v1024 = vmax.f32 %v1008, 0.0
        %v1025 = vmax.f32 %v1009, 0.0
        %v1026 = vmax.f32 %v1010, 0.0
        %v1027 = vpack.c.bf16 %v1012, %v1011
        %v1028 = vpack.c.bf16 %v1014, %v1013
        %v1029 = vpack.c.bf16 %v1016, %v1015
        %v1030 = vpack.c.bf16 %v1018, %v1017
        %v1031 = vpack.c.bf16 %v1020, %v1019
        %v1032 = vpack.c.bf16 %v1022, %v1021
        %v1033 = vpack.c.bf16 %v1024, %v1023
        %v1034 = vpack.c.bf16 %v1026, %v1025
        %v1043 = vunpack.c.l.b16 %v1027
        %v1044 = vunpack.c.h.b16 %v1027
        %v1045 = vunpack.c.l.b16 %v1028
        %v1046 = vunpack.c.h.b16 %v1028
        %v1047 = vunpack.c.l.b16 %v1029
        %v1048 = vunpack.c.h.b16 %v1029
        %v1049 = vunpack.c.l.b16 %v1030
        %v1050 = vunpack.c.h.b16 %v1030
        %v1051 = vunpack.c.l.b16 %v1031
        %v1052 = vunpack.c.h.b16 %v1031
        %v1053 = vunpack.c.l.b16 %v1032
        %v1054 = vunpack.c.h.b16 %v1032
        %v1055 = vunpack.c.l.b16 %v1033
        %v1056 = vunpack.c.h.b16 %v1033
        %v1057 = vunpack.c.l.b16 %v1034
        %v1058 = vunpack.c.h.b16 %v1034
        %v1059 = vpack.c.b16 %v1043, %v1043
        %v1060 = vpack.c.b16 %v1044, %v1044
        %v1061 = vpack.c.b16 %v1045, %v1045
        %v1062 = vpack.c.b16 %v1046, %v1046
        %v1063 = vpack.c.b16 %v1047, %v1047
        %v1064 = vpack.c.b16 %v1048, %v1048
        %v1065 = vpack.c.b16 %v1049, %v1049
        %v1066 = vpack.c.b16 %v1050, %v1050
        %v1067 = vpack.c.b16 %v1051, %v1051
        %v1068 = vpack.c.b16 %v1052, %v1052
        %v1069 = vpack.c.b16 %v1053, %v1053
        %v1070 = vpack.c.b16 %v1054, %v1054
        %v1071 = vpack.c.b16 %v1055, %v1055
        %v1072 = vpack.c.b16 %v1056, %v1056
        %v1073 = vpack.c.b16 %v1057, %v1057
        %v1074 = vpack.c.b16 %v1058, %v1058
        %1091 = vst [vmem:[%s341] sm:$0xf] %v1059
        %1092 = vst [vmem:[%s341 + $0x4] sm:$0xf] %v1060
        %1093 = vst [vmem:[%s341 + $0x8] sm:$0xf] %v1061
        %1094 = vst [vmem:[%s341 + $0xc] sm:$0xf] %v1062
        %1095 = vst [vmem:[%s341 + $0x10] sm:$0xf] %v1063
        %1096 = vst [vmem:[%s341 + $0x14] sm:$0xf] %v1064
        %1097 = vst [vmem:[%s341 + $0x18] sm:$0xf] %v1065
        %1098 = vst [vmem:[%s341 + $0x1c] sm:$0xf] %v1066
        %1099 = vst [vmem:[%s341 + $0x20] sm:$0xf] %v1067
        %1100 = vst [vmem:[%s341 + $0x24] sm:$0xf] %v1068
        %1101 = vst [vmem:[%s341 + $0x28] sm:$0xf] %v1069
        %1102 = vst [vmem:[%s341 + $0x2c] sm:$0xf] %v1070
        %1103 = vst [vmem:[%s341 + $0x30] sm:$0xf] %v1071
        %1104 = vst [vmem:[%s341 + $0x34] sm:$0xf] %v1072
        %1105 = vst [vmem:[%s341 + $0x38] sm:$0xf] %v1073
        %1106 = vst [vmem:[%s341 + $0x3c] sm:$0xf] %v1074
        %s1107 = sand.u32 %s228, 1
        %s1108 = scalar_lea.sflag [#allocation3], %s1107
        %s1109 = sand.u32 %s228, 1
        %s1110 = smul.addr %s1109, 64
        %s1111 = scalar_lea.vmem [#allocation2], %s1110
        // Predicated region
        $region53: #{tpu_custom_call.1} parent=51 // pred_check
          %p1112 = pneg %p238
        $region54: #{tpu_custom_call.1} parent=51 // pred_check_branch
          %1114 = sbr.rel (%p1112) target = $region56
        $region55: #{tpu_custom_call.1} parent=51 // pred_region
          %s1115 = smul.u32 %s26, 2
          %s1116 = sadd.s32 %s1115, %s27
          %s1117 = smul.u32 16, %s1116
          %s1119 = ssub.s32 1024, 1024
          %1120 = vsyncadd %s1108, %s1119
          %s1121 = smul.addr %s1117, 64
          %s1122 = scalar_lea.hbm %s8, %s1121
          %s1123 = sshll.u32 %s1111, 4
          %s1124 = int_to_ptr.vmem [resolvable:$true] %s1123
          %1129 = dma.vmem_to_hbm [thread:$0]  %s1124, 1024, %s1122, %s1108, 64, 64, 4
        $region56: #{tpu_custom_call.1} parent=51 // pred_fallthru
          _
      $region52: #{tpu_custom_call.1} parent=5 // pred_fallthru
        _
      %p1130 = scmp.le.s32.totalorder 2, %s17
      // Predicated region
      $region57: #{tpu_custom_call.1} parent=5 // pred_check
        %p1131 = pneg %p1130
      $region58: #{tpu_custom_call.1} parent=5 // pred_check_branch
        %1133 = sbr.rel (%p1131) target = $region60
      $region59: #{tpu_custom_call.1} parent=5 // pred_region
        %s1134 = ssub.s32 %s17, 2
        // Predicated region
        $region61: #{tpu_custom_call.1} parent=59 // pred_check
          %p1135 = pneg %p244
        $region62: #{tpu_custom_call.1} parent=59 // pred_check_branch
          %1137 = sbr.rel (%p1135) target = $region64
        $region63: #{tpu_custom_call.1} parent=59 // pred_region
          %s1138 = sand.u32 %s229, 1
          %s1139 = scalar_lea.sflag [#allocation3], %s1138
          %s1140 = sand.u32 %s229, 1
          %s1141 = smul.addr %s1140, 64
          %s1142 = scalar_lea.vmem [#allocation2], %s1141
          %1143 = dma.done %s1139, 1024
        $region64: #{tpu_custom_call.1} parent=59 // pred_fallthru
          _
      $region60: #{tpu_custom_call.1} parent=5 // pred_fallthru
        _
    $region6: #{tpu_custom_call.1} parent=1 // loop_footer
      %s21 = sadd.s32 1, %s17
    $region7: #{tpu_custom_call.1} parent=1 // loop_footer_branch
      %16 = sbr.rel target = $region3
    $region8: #{tpu_custom_call.1} parent=1 // loop_exit
      _
    %1144 = vsyncpa [#allocation3], 1
    %s1145 = scalar_lea.sflag [#allocation3], 1
    %1146 = vsyncpa %s1145, 1

</llo_original>
